<compile_context>
chip_gen: v5e
topology: v5e:2x2
jax: 0.10.0
libtpu: 0.0.40
codegen_flags: <defaults>
</compile_context>

<pallas_src>
import functools

import jax
import jax.numpy as jnp
from jax import lax
from jax.experimental import pallas as pl
from jax.experimental.pallas import tpu as pltpu


def _round_up(n, m):
    return (n + m - 1) // m * m


def _mlp_tail(ht, b1_ref, w2_ref, b2_ref, o_ref, precision):
    # ht: (5, TM) layer-1 pre-activation, feature-major (batch on the lane axis).
    ht = jnp.maximum(ht + b1_ref[...], 0.0)                    # bias + ReLU
    yt = lax.dot_general(w2_ref[...], ht,
                         dimension_numbers=(((1,), (0,)), ((), ())),
                         preferred_element_type=jnp.float32,
                         precision=precision)                  # (1, TM)
    o_ref[...] = (yt + b2_ref[...]).astype(o_ref.dtype)


def mlp_kernel_batch_major(x_ref, w1_ref, b1_ref, w2_ref, b2_ref, o_ref,
                           *, precision=None):
    # x_ref: (TM, 10).  h^T = W1 @ x^T (contract last dims of both operands,
    # the "NT" matmul pattern) so the batch lands on the 128-lane axis and the
    # output tile is a lane-dense (1, TM) row.
    ht = lax.dot_general(w1_ref[...], x_ref[...],
                         dimension_numbers=(((1,), (1,)), ((), ())),
                         preferred_element_type=jnp.float32,
                         precision=precision)                  # (5, TM)
    _mlp_tail(ht, b1_ref, w2_ref, b2_ref, o_ref, precision)


def mlp_kernel_feature_major(xt_ref, w1_ref, b1_ref, w2_ref, b2_ref, o_ref,
                             *, precision=None):
    # xt_ref: (10, TM) lane-dense feature-major tile; plain NN dot.
    ht = lax.dot_general(w1_ref[...], xt_ref[...],
                         dimension_numbers=(((1,), (0,)), ((), ())),
                         preferred_element_type=jnp.float32,
                         precision=precision)                  # (5, TM)
    _mlp_tail(ht, b1_ref, w2_ref, b2_ref, o_ref, precision)


def _pallas_mlp(x, x_spec, kernel, w1, b1, w2, b2, tm, g, vmem_bytes_per_step):
    """Shared pallas_call: streams batch tiles, keeps weights VMEM-resident."""
    b1_2d = b1.reshape(5, 1)
    b2_2d = b2.reshape(1, 1)
    b_total = g * tm
    # Tile-derived scoped-VMEM request (+ headroom), floored at 32 MiB and
    # capped well under every generation's physical VMEM for the default tile.
    vmem_limit = int(min(max(vmem_bytes_per_step + (4 << 20), 32 << 20), 100 << 20))

    return pl.pallas_call(
        kernel,
        out_shape=jax.ShapeDtypeStruct((g, 1, tm), jnp.float32),
        grid=(g,),
        in_specs=[
            x_spec,                                       # streamed batch tile
            pl.BlockSpec((5, 10), lambda i: (0, 0)),      # VMEM-resident weights
            pl.BlockSpec((5, 1), lambda i: (0, 0)),       # (constant block idx ->
            pl.BlockSpec((1, 5), lambda i: (0, 0)),       #  no re-DMA per step)
            pl.BlockSpec((1, 1), lambda i: (0, 0)),
        ],
        # Leading grid dim squeezed; each step writes one lane-dense (1, tm) row.
        out_specs=pl.BlockSpec((None, 1, tm), lambda i: (i, 0, 0)),
        # TODO(synk): verify in an xprof trace that both v7x TensorCores pick up
        # grid steps; if not, switch this axis to pltpu.CORE_PARALLEL.
        compiler_params=pltpu.CompilerParams(
            dimension_semantics=("parallel",),
            vmem_limit_bytes=vmem_limit),
        cost_estimate=pl.CostEstimate(
            flops=2 * b_total * (10 * 5 + 5 * 1),
            transcendentals=0,
            bytes_accessed=(b_total * (10 + 1) + 5 * 10 + 5 + 5 + 1) * 4),
    )(x, w1, b1_2d, w2, b2_2d)                            # -> (g, 1, tm) slab


def global_model_forward(x, w1, b1, w2, b2, *, block_m=32768, precision=None,
                         squeeze_output=False):
    """Fused fc1 -> ReLU -> fc2.  x: (B, 10) f32 batch-major (torch layout).

    Returns (B, 1) (torch-shaped) by default, or (B,) lane-major with
    squeeze_output=True to avoid the column relayout on a BW-bound op.
    """
    B, F = x.shape
    assert F == 10 and w1.shape == (5, 10) and b1.shape == (5,)
    assert w2.shape == (1, 5) and b2.shape == (1,)

    tm = min(_round_up(block_m, 128), _round_up(B, 128))
    g = pl.cdiv(B, tm)          # ragged last block: NO pre-pad pass over x
    # Per-step VMEM: (tm, 10) f32 lane-pads 10->128 -> tm*512 B; (1, tm) out
    # sublane-pads 1->8 -> tm*32 B; both double-buffered.
    vmem_per_step = 2 * tm * 512 + 2 * tm * 32

    kernel = functools.partial(mlp_kernel_batch_major, precision=precision)
    x_spec = pl.BlockSpec((tm, 10), lambda i: (i, 0))
    out = _pallas_mlp(x, x_spec, kernel, w1, b1, w2, b2, tm, g, vmem_per_step)

    flat = out.reshape(g * tm)[:B]          # lane-major, batch order; padded
    if squeeze_output:                      # tail (unspecified values) dropped
        return flat                         # (B,)
    return flat[:, None]                    # (B, 1) to match the torch module


def global_model_forward_feature_major(x_t, w1, b1, w2, b2, *, block_m=131072,
                                       precision=None):
    """Same fused MLP with feature-major activations.  x_t: (10, B) f32.

    Use when activations are already feature-major upstream (do NOT insert a
    standalone transpose just to call this).  The x tile is lane-dense, so
    much larger batch tiles fit VMEM -- the layout of choice on v7x.
    Returns (B,) lane-major.
    """
    F, B = x_t.shape
    assert F == 10 and w1.shape == (5, 10) and w2.shape == (1, 5)

    tm = min(_round_up(block_m, 128), _round_up(B, 128))
    g = pl.cdiv(B, tm)
    # Per-step VMEM: (10, tm) f32 sublane-pads 10->16 -> tm*64 B; out tm*32 B.
    vmem_per_step = 2 * tm * 64 + 2 * tm * 32

    kernel = functools.partial(mlp_kernel_feature_major, precision=precision)
    x_spec = pl.BlockSpec((10, tm), lambda i: (0, i))
    out = _pallas_mlp(x_t, x_spec, kernel, w1, b1, w2, b2, tm, g, vmem_per_step)
    return out.reshape(g * tm)[:B]          # (B,) lane-major


def init_params(key):
    """torch.nn.Linear-style U(-1/sqrt(fan_in), +1/sqrt(fan_in)) init, torch layout."""
    k1, k2, k3, k4 = jax.random.split(key, 4)
    lim1 = 1.0 / jnp.sqrt(10.0)
    lim2 = 1.0 / jnp.sqrt(5.0)
    w1 = jax.random.uniform(k1, (5, 10), jnp.float32, -lim1, lim1)
    b1 = jax.random.uniform(k2, (5,), jnp.float32, -lim1, lim1)
    w2 = jax.random.uniform(k3, (1, 5), jnp.float32, -lim2, lim2)
    b2 = jax.random.uniform(k4, (1,), jnp.float32, -lim2, lim2)
    return w1, b1, w2, b2


if __name__ == "__main__":
    key = jax.random.PRNGKey(0)
    kx, kp = jax.random.split(key)
    w1, b1, w2, b2 = init_params(kp)

    def ref_fwd(x):
        return jnp.maximum(x @ w1.T + b1, 0.0) @ w2.T + b2

    # Batch-major path: single-tile grid (B=8) and a ragged multi-tile grid
    # (B=300, tm=128 -> 3 blocks, last one partial; no padding pre-pass).
    for batch, bm in ((8, 32768), (300, 128)):
        x = jax.random.normal(jax.random.fold_in(kx, batch), (batch, 10),
                              jnp.float32)
        out = jax.block_until_ready(
            global_model_forward(x, w1, b1, w2, b2, block_m=bm))
        assert out.shape == (batch, 1)
        assert jnp.allclose(out, ref_fwd(x), atol=1e-5, rtol=1e-5)

    # Lane-major output variant (no (B,1) relayout).
    x = jax.random.normal(jax.random.fold_in(kx, 5), (300, 10), jnp.float32)
    out_sq = jax.block_until_ready(
        global_model_forward(x, w1, b1, w2, b2, block_m=128,
                             squeeze_output=True))
    assert out_sq.shape == (300,)
    assert jnp.allclose(out_sq[:, None], ref_fwd(x), atol=1e-5, rtol=1e-5)

    # Feature-major path (x already (10, B) upstream; transpose here is only to
    # build the test input).
    x = jax.random.normal(jax.random.fold_in(kx, 7), (300, 10), jnp.float32)
    out_fm = jax.block_until_ready(
        global_model_forward_feature_major(jnp.asarray(x.T), w1, b1, w2, b2,
                                           block_m=128))
    assert out_fm.shape == (300,)
    assert jnp.allclose(out_fm[:, None], ref_fwd(x), atol=1e-5, rtol=1e-5)

    print("KERNEL_OK")
</pallas_src>

<mosaic_0001>
module attributes {stable_mosaic.version = 11 : i64} {
  func.func @mlp_kernel_batch_major(%arg0: i32, %arg1: memref<128x10xf32, #tpu.memory_space<vmem>>, %arg2: memref<5x10xf32, #tpu.memory_space<vmem>>, %arg3: memref<5x1xf32, #tpu.memory_space<vmem>>, %arg4: memref<1x5xf32, #tpu.memory_space<vmem>>, %arg5: memref<1x1xf32, #tpu.memory_space<vmem>>, %arg6: memref<1x1x128xf32, #tpu.memory_space<vmem>>) attributes {dimension_semantics = [#tpu.dimension_semantics<parallel>], iteration_bounds = array<i64: 1>, scalar_prefetch = 0 : i64, scratch_operands = 0 : i64, tpu.core_type = #tpu.core_type<tc>, window_params = [{transform_indices = @transform_0, window_bounds = array<i64: 128, 10>}, {pipeline_mode = #tpu.pipeline_mode<synchronous>, transform_indices = @transform_1, window_bounds = array<i64: 5, 10>}, {pipeline_mode = #tpu.pipeline_mode<synchronous>, transform_indices = @transform_2, window_bounds = array<i64: 5, 1>}, {pipeline_mode = #tpu.pipeline_mode<synchronous>, transform_indices = @transform_3, window_bounds = array<i64: 1, 5>}, {pipeline_mode = #tpu.pipeline_mode<synchronous>, transform_indices = @transform_4, window_bounds = array<i64: 1, 1>}, {transform_indices = @transform_5, window_bounds = array<i64: 1, 1, 128>}]} {
    %c0 = arith.constant 0 : index
    %c0_0 = arith.constant 0 : index
    %0 = vector.load %arg2[%c0, %c0_0] : memref<5x10xf32, #tpu.memory_space<vmem>>, vector<5x10xf32>
    %c0_1 = arith.constant 0 : index
    %c0_2 = arith.constant 0 : index
    %1 = vector.load %arg1[%c0_1, %c0_2] : memref<128x10xf32, #tpu.memory_space<vmem>>, vector<128x10xf32>
    %cst = arith.constant dense<0.000000e+00> : vector<5x128xf32>
    %2 = tpu.matmul %0, %1, %cst {dimension_numbers = #tpu.dot_dimension_numbers<[1], [1], [0], [0], [0, 0, 1, 0], [], []>} : vector<5x10xf32>, vector<128x10xf32>, vector<5x128xf32> -> vector<5x128xf32>
    %c0_3 = arith.constant 0 : index
    %c0_4 = arith.constant 0 : index
    %3 = vector.load %arg3[%c0_3, %c0_4] : memref<5x1xf32, #tpu.memory_space<vmem>>, vector<5x1xf32>
    %4 = vector.broadcast %3 : vector<5x1xf32> to vector<5x128xf32>
    %5 = arith.addf %2, %4 : vector<5x128xf32>
    %cst_5 = arith.constant 0.000000e+00 : f32
    %6 = vector.broadcast %cst_5 : f32 to vector<5x128xf32>
    %7 = arith.maximumf %5, %6 : vector<5x128xf32>
    %c0_6 = arith.constant 0 : index
    %c0_7 = arith.constant 0 : index
    %8 = vector.load %arg4[%c0_6, %c0_7] : memref<1x5xf32, #tpu.memory_space<vmem>>, vector<1x5xf32>
    %cst_8 = arith.constant dense<0.000000e+00> : vector<1x128xf32>
    %9 = tpu.matmul %8, %7, %cst_8 {dimension_numbers = #tpu.dot_dimension_numbers<[1], [0], [0], [1], [0, 0, 1, 1], [], []>} : vector<1x5xf32>, vector<5x128xf32>, vector<1x128xf32> -> vector<1x128xf32>
    %c0_9 = arith.constant 0 : index
    %c0_10 = arith.constant 0 : index
    %10 = vector.load %arg5[%c0_9, %c0_10] : memref<1x1xf32, #tpu.memory_space<vmem>>, vector<1x1xf32>
    %11 = vector.broadcast %10 : vector<1x1xf32> to vector<1x128xf32>
    %12 = arith.addf %9, %11 : vector<1x128xf32>
    %c0_11 = arith.constant 0 : index
    %c0_12 = arith.constant 0 : index
    %c0_13 = arith.constant 0 : index
    %13 = vector.load %arg6[%c0_11, %c0_12, %c0_13] : memref<1x1x128xf32, #tpu.memory_space<vmem>>, vector<1x1x128xf32>
    %14 = vector.shape_cast %13 : vector<1x1x128xf32> to vector<1x128xf32>
    %15 = vector.shape_cast %12 : vector<1x128xf32> to vector<1x1x128xf32>
    tpu.vector_store %arg6[%c0_11, %c0_12, %c0_13], %15 {strides = array<i32>} : memref<1x1x128xf32, #tpu.memory_space<vmem>>, vector<1x1x128xf32>,
    return
  }
  func.func @transform_0(%arg0: i32) -> (i32, i32) {
    %c0_i32 = arith.constant 0 : i32
    %c0_i32_0 = arith.constant 0 : i32
    return %arg0, %c0_i32 : i32, i32
  }
  func.func @transform_1(%arg0: i32) -> (i32, i32) {
    %c0_i32 = arith.constant 0 : i32
    %c0_i32_0 = arith.constant 0 : i32
    %c0_i32_1 = arith.constant 0 : i32
    return %c0_i32, %c0_i32_0 : i32, i32
  }
  func.func @transform_2(%arg0: i32) -> (i32, i32) {
    %c0_i32 = arith.constant 0 : i32
    %c0_i32_0 = arith.constant 0 : i32
    %c0_i32_1 = arith.constant 0 : i32
    return %c0_i32, %c0_i32_0 : i32, i32
  }
  func.func @transform_3(%arg0: i32) -> (i32, i32) {
    %c0_i32 = arith.constant 0 : i32
    %c0_i32_0 = arith.constant 0 : i32
    %c0_i32_1 = arith.constant 0 : i32
    return %c0_i32, %c0_i32_0 : i32, i32
  }
  func.func @transform_4(%arg0: i32) -> (i32, i32) {
    %c0_i32 = arith.constant 0 : i32
    %c0_i32_0 = arith.constant 0 : i32
    %c0_i32_1 = arith.constant 0 : i32
    return %c0_i32, %c0_i32_0 : i32, i32
  }
  func.func @transform_5(%arg0: i32) -> (i32, i32, i32) {
    %c0_i32 = arith.constant 0 : i32
    %c0_i32_0 = arith.constant 0 : i32
    %c0_i32_1 = arith.constant 0 : i32
    return %arg0, %c0_i32, %c0_i32_0 : i32, i32, i32
  }
}

</mosaic_0001>

<llo_original>
// kernel: tpu_custom_call.1
$region0: #{tpu_custom_call.1}
  #allocation0 [shape = 'u32[]', space=smem, size = 0x4, offset = 0x4, fixed_abs, tag = 'smem constant byte address 0x4 - core index']
  #allocation1 [shape = 'u32[72,128]{1,0:T(1,128)}', space=vmem, size = 0x9000, scoped, tag = 'internal scratch']
  #allocation2 [shape = 'f32[1,1]{1,0:T(1,128)S(1)}', space=vmem, size = 0x200, scoped, tag = 'scoped memory for tpu_custom_call.1']
  %s0 = inlined_call_operand.vmem [shape: f32[8,10], index: 0, kind: input, shape index: {}]
  %s1 = inlined_call_operand.hbm [shape: f32[5,10], index: 1, kind: input, shape index: {}]
  %s2 = inlined_call_operand.vmem [shape: f32[5,1], index: 2, kind: input, shape index: {}]
  %s3 = inlined_call_operand.vmem [shape: f32[1,5], index: 3, kind: input, shape index: {}]
  %s4 = inlined_call_operand.<no memory space> [shape: f32[1,1], index: 4, kind: input, shape index: {}]
  %s5 = inlined_call_operand.hbm [shape: f32[1,1,128], index: 5, kind: output, shape index: {}]
  %s6 = sld [smem:[#allocation0]]
  $region34: #{tpu_custom_call.1} parent=0
    _
  %s8 = ssub.s32 1, %s6
  %s9 = scalar_select 0, %s8, %s6
  %v10 = vstv %s4
  %11 = vst [vmem:[#allocation2] sm:$0x1] %v10
  $region1: #{tpu_custom_call.1} parent=0
    #allocation3 [shape = 'u8[4096]{0}', space=vmem, size = 0x1000, scoped, tag = 'input window, operand 1, single buffered']
    #allocation4 [shape = 's32[1]{0}', space=sflag, size = 0x4, scoped, tag = 'scoped memory for tpu_custom_call.1']
    #allocation5 [shape = 's32[1]{0}', space=sflag, size = 0x4, scoped, tag = 'scoped memory for tpu_custom_call.1']
    #allocation6 [shape = 'u8[512]{0}', space=vmem, size = 0x400, scoped, tag = 'output window, operand 0, single buffered']
    %12 = vsyncpa [#allocation4], 0
    %13 = vsyncpa [#allocation5], 0
    // Predicated region
    $region2: #{tpu_custom_call.1} parent=1 // pred_check
      _
    $region3: #{tpu_custom_call.1} parent=1 // pred_check_branch
      %15 = sbr.rel (0) target = $region5
    $region4: #{tpu_custom_call.1} parent=1 // pred_region
      _
    $region5: #{tpu_custom_call.1} parent=1 // pred_fallthru
      _
    // Predicated region
    $region6: #{tpu_custom_call.1} parent=1 // pred_check
      _
    $region7: #{tpu_custom_call.1} parent=1 // pred_check_branch
      %17 = sbr.rel (0) target = $region9
    $region8: #{tpu_custom_call.1} parent=1 // pred_region
      %19 = vsyncadd [#allocation4], 0
      %s21 = sshll.u32 %s1, 4
      %s22 = int_to_ptr.hbm [resolvable:$true] %s21
      %s23 = sshll.u32 [#allocation3], 4
      %s24 = int_to_ptr.vmem [resolvable:$true] %s23
      %26 = dma.hbm_to_vmem [thread:$0]  %s22, 128, %s24, [#allocation4]
    $region9: #{tpu_custom_call.1} parent=1 // pred_fallthru
      _
    // Predicated region
    $region10: #{tpu_custom_call.1} parent=1 // pred_check
      _
    $region11: #{tpu_custom_call.1} parent=1 // pred_check_branch
      %28 = sbr.rel (0) target = $region13
    $region12: #{tpu_custom_call.1} parent=1 // pred_region
      _
    $region13: #{tpu_custom_call.1} parent=1 // pred_fallthru
      _
    // Predicated region
    $region14: #{tpu_custom_call.1} parent=1 // pred_check
      _
    $region15: #{tpu_custom_call.1} parent=1 // pred_check_branch
      %30 = sbr.rel (0) target = $region17
    $region16: #{tpu_custom_call.1} parent=1 // pred_region
      _
    $region17: #{tpu_custom_call.1} parent=1 // pred_fallthru
      _
    // Predicated region
    $region18: #{tpu_custom_call.1} parent=1 // pred_check
      _
    $region19: #{tpu_custom_call.1} parent=1 // pred_check_branch
      %32 = sbr.rel (0) target = $region21
    $region20: #{tpu_custom_call.1} parent=1 // pred_region
      _
    $region21: #{tpu_custom_call.1} parent=1 // pred_fallthru
      _
    // Predicated region
    $region22: #{tpu_custom_call.1} parent=1 // pred_check
      _
    $region23: #{tpu_custom_call.1} parent=1 // pred_check_branch
      %34 = sbr.rel (0) target = $region25
    $region24: #{tpu_custom_call.1} parent=1 // pred_region
      %36 = dma.done [#allocation4], 128
    $region25: #{tpu_custom_call.1} parent=1 // pred_fallthru
      _
    %v37 = vld [vmem:[#allocation3] sm:$0x1f]
    %v38 = vld [vmem:[%s0] sm:$0xff]
    %v39 = vld [vmem:[%s0 + $0x8] sm:$0xff]
    %v40 = vld [vmem:[%s0 + $0x10] sm:$0xff]
    %v41 = vld [vmem:[%s0 + $0x18] sm:$0xff]
    %v42 = vld [vmem:[%s0 + $0x20] sm:$0xff]
    %v43 = vld [vmem:[%s0 + $0x28] sm:$0xff]
    %v44 = vld [vmem:[%s0 + $0x30] sm:$0xff]
    %v45 = vld [vmem:[%s0 + $0x38] sm:$0xff]
    %v46 = vld [vmem:[%s0 + $0x40] sm:$0xff]
    %v47 = vld [vmem:[%s0 + $0x48] sm:$0xff]
    %v48 = vld [vmem:[%s0 + $0x50] sm:$0xff]
    %v49 = vld [vmem:[%s0 + $0x58] sm:$0xff]
    %v50 = vld [vmem:[%s0 + $0x60] sm:$0xff]
    %v51 = vld [vmem:[%s0 + $0x68] sm:$0xff]
    %v52 = vld [vmem:[%s0 + $0x70] sm:$0xff]
    %v53 = vld [vmem:[%s0 + $0x78] sm:$0xff]
    %v54 = vld [vmem:[%s2] sm:$0x1f]
    %56 = vset.pattern.permute.xlu0 0
    %57 = vperm.xlu0 %56, %v54
    %v58 = vpop.permute.xlu0 %57
    %vm60 = vcmask 80896
    %v62 = vsel %vm60, %v37, 0
    %v65 = vsel %vm60, %v38, 0
    %v68 = vsel %vm60, %v39, 0
    %v71 = vsel %vm60, %v40, 0
    %v74 = vsel %vm60, %v41, 0
    %v77 = vsel %vm60, %v42, 0
    %v80 = vsel %vm60, %v43, 0
    %v83 = vsel %vm60, %v44, 0
    %v86 = vsel %vm60, %v45, 0
    %v89 = vsel %vm60, %v46, 0
    %v92 = vsel %vm60, %v47, 0
    %v95 = vsel %vm60, %v48, 0
    %v98 = vsel %vm60, %v49, 0
    %v101 = vsel %vm60, %v50, 0
    %v104 = vsel %vm60, %v51, 0
    %v107 = vsel %vm60, %v52, 0
    %v110 = vsel %vm60, %v53, 0
    %112 = vmatpush.xpose.msra.mxu0 %v110
    %113 = vmatpush.xpose.msra.mxu0 %v107
    %114 = vmatpush.xpose.msra.mxu0 %v104
    %115 = vmatpush.xpose.msra.mxu0 %v101
    %116 = vmatpush.xpose.msra.mxu0 %v98
    %117 = vmatpush.xpose.msra.mxu0 %v95
    %118 = vmatpush.xpose.msra.mxu0 %v92
    %119 = vmatpush.xpose.msra.mxu0 %v89
    %120 = vmatpush.xpose.msra.mxu0 %v86
    %121 = vmatpush.xpose.msra.mxu0 %v83
    %122 = vmatpush.xpose.msra.mxu0 %v80
    %123 = vmatpush.xpose.msra.mxu0 %v77
    %124 = vmatpush.xpose.msra.mxu0 %v74
    %125 = vmatpush.xpose.msra.mxu0 %v71
    %126 = vmatpush.xpose.msra.mxu0 %v68
    %127 = vmatpush.xpose.msra.mxu0 %v65
    %128 = vmatmul.f32.gmra.mxu0 %v62
    %v129 = vpop.f32.mrf.mxu0
    %v130 = vadd.f32 %v58, %v129
    %131 = vdwg.mxu0
    %v132 = vmax.f32 %v130, 0.0
    %v133 = vld [vmem:[%s3] sm:$0x1]
    %v134 = vld [vmem:[#allocation2] sm:$0x1]
    %136 = vset.pattern.permute.xlu0 0
    %137 = vperm.xlu0 %136, %v134
    %v138 = vpop.permute.xlu0 %137
    %v140 = vperm.slane %v138, 0
    %vm141 = vcmask 39936
    %v143 = vsel %vm141, %v133, 0
    %vm145 = vcmask 1044480
    %v147 = vsel %vm145, %v132, 0
    %149 = vmatpush.msra.mxu0 0.0
    %150 = vmatpush.msra.mxu0 0.0
    %151 = vmatpush.msra.mxu0 0.0
    %152 = vmatpush.msra.mxu0 0.0
    %153 = vmatpush.msra.mxu0 0.0
    %154 = vmatpush.msra.mxu0 0.0
    %155 = vmatpush.msra.mxu0 0.0
    %156 = vmatpush.msra.mxu0 0.0
    %157 = vmatpush.msra.mxu0 0.0
    %158 = vmatpush.msra.mxu0 0.0
    %159 = vmatpush.msra.mxu0 0.0
    %160 = vmatpush.msra.mxu0 0.0
    %161 = vmatpush.msra.mxu0 0.0
    %162 = vmatpush.msra.mxu0 0.0
    %163 = vmatpush.msra.mxu0 0.0
    %164 = vmatpush.msra.mxu0 %v147
    %165 = vmatmul.f32.gmra.mxu0 %v143
    %v166 = vpop.f32.mrf.mxu0
    %v167 = vadd.f32 %v140, %v166
    %168 = vdwg.mxu0
    %169 = vst [vmem:[#allocation6] sm:$0x1] %v167
    // Predicated region
    $region26: #{tpu_custom_call.1} parent=1 // pred_check
      _
    $region27: #{tpu_custom_call.1} parent=1 // pred_check_branch
      %171 = sbr.rel (0) target = $region29
    $region28: #{tpu_custom_call.1} parent=1 // pred_region
      %173 = vsyncadd [#allocation5], 0
      %s175 = sshll.u32 [#allocation6], 4
      %s176 = int_to_ptr.vmem [resolvable:$true] %s175
      %s177 = sshll.u32 %s5, 4
      %s178 = int_to_ptr.hbm [resolvable:$true] %s177
      %180 = dma.vmem_to_hbm [thread:$0]  %s176, 16, %s178, [#allocation5]
    $region29: #{tpu_custom_call.1} parent=1 // pred_fallthru
      _
    // Predicated region
    $region30: #{tpu_custom_call.1} parent=1 // pred_check
      _
    $region31: #{tpu_custom_call.1} parent=1 // pred_check_branch
      %182 = sbr.rel (0) target = $region33
    $region32: #{tpu_custom_call.1} parent=1 // pred_region
      %184 = dma.done [#allocation5], 16
    $region33: #{tpu_custom_call.1} parent=1 // pred_fallthru
      _
    %185 = vsyncpa [#allocation4], 1
    %186 = vsyncpa [#allocation5], 1

</llo_original>
